<compile_context>
chip_gen: v5e
topology: v5e:2x2
jax: 0.10.0
libtpu: 0.0.40
codegen_flags: <defaults>
</compile_context>

<pallas_src>
import jax
import jax.numpy as jnp
from jax.experimental import pallas as pl
from jax.experimental.pallas import tpu as pltpu


def _round_up(n: int, m: int) -> int:
    return ((n + m - 1) // m) * m


def reward_head_kernel(x_ref, w_ref, out_ref, acc_ref):
    # x_ref:   (TB, TS, Hp) bfloat16   streamed hidden-state tile
    # w_ref:   (Hp, 128)    float32    reward-head weight, replicated across lanes
    #                                   (constant index_map -> resident, loaded once)
    # out_ref: (TB, 128)    float32    per-example sum_s(x @ w), replicated on lanes
    # acc_ref: (TB, Hp)     float32    VMEM scratch: running sum over the sequence
    s_step = pl.program_id(1)

    @pl.when(s_step == 0)
    def _init():
        acc_ref[...] = jnp.zeros_like(acc_ref)

    # Pool the tile over the sequence axis (pure VPU adds, f32 accumulator).
    # No x-sized multiply, no x-sized cross-lane reduce; hides under the DMA.
    acc_ref[...] += jnp.sum(x_ref[...].astype(jnp.float32), axis=1)

    @pl.when(s_step == pl.num_programs(1) - 1)
    def _finalize():
        # Single MXU contraction per B-tile: (TB, Hp) @ (Hp, 128) -> (TB, 128).
        # All 128 output lanes are identical (w replicated) -> unmasked stores.
        out_ref[...] = jnp.dot(acc_ref[...], w_ref[...],
                               preferred_element_type=jnp.float32)


def reward_model_loss(x, w, bias, labels, *, tb=8, tile_bytes_target=8 * 1024 * 1024):
    """RewardModel.forward equivalent: returns the scalar MSE loss.

    x:      (B, S, H) hidden states (any float dtype; streamed as bf16)
    w:      (1, H)    reward-head weight
    bias:   (1, 1)    reward-head bias
    labels: (B, 1)    regression targets
    """
    B, S, H = x.shape

    # ---- lane/sublane-aligned padded shapes and tile sizes -------------------
    Hp = _round_up(max(H, 128), 128)            # lane axis: multiple of 128
    TB = tb                                     # B tile (multiple of 8 for out block)
    B_pad = _round_up(max(B, TB), TB)
    # Choose TS so one bf16 x tile is ~tile_bytes_target (double-buffered pair
    # stays ~16 MiB -> safe on v7x's 64 MiB VMEM; raise target on v5e/v6e if desired).
    bytes_per_seq_row = TB * Hp * 2             # bf16
    ts_cap = max(16, (tile_bytes_target // bytes_per_seq_row) // 16 * 16)
    TS = min(ts_cap, _round_up(S, 16))          # bf16 sublane packing: multiple of 16
    S_pad = _round_up(S, TS)

    # ---- prepare inputs (pads are zero-width no-ops for aligned real shapes) --
    x_bf = x.astype(jnp.bfloat16)
    x_p = jnp.pad(x_bf, ((0, B_pad - B), (0, S_pad - S), (0, Hp - H)))
    w_pad = jnp.pad(w[0].astype(jnp.float32), (0, Hp - H))          # (Hp,)
    w_rep = jnp.broadcast_to(w_pad[:, None], (Hp, 128))             # lane-replicated

    nb, ns = B_pad // TB, S_pad // TS

    sums = pl.pallas_call(
        reward_head_kernel,
        out_shape=jax.ShapeDtypeStruct((B_pad, 128), jnp.float32),
        grid_spec=pltpu.PrefetchScalarGridSpec(
            num_scalar_prefetch=0,
            grid=(nb, ns),                                   # reduction axis last
            in_specs=[
                pl.BlockSpec((TB, TS, Hp), lambda b, s: (b, s, 0)),   # x: streamed
                pl.BlockSpec((Hp, 128), lambda b, s: (0, 0)),         # w: resident
            ],
            out_specs=pl.BlockSpec((TB, 128), lambda b, s: (b, 0)),
            scratch_shapes=[pltpu.VMEM((TB, Hp), jnp.float32)],
        ),
        compiler_params=pltpu.CompilerParams(
            dimension_semantics=("parallel", "arbitrary"),
            vmem_limit_bytes=48 * 1024 * 1024,
        ),
    )(x_p, w_rep)

    # Tiny O(B) tail in plain JAX: zero-padded rows/cols contribute nothing, so
    # dividing by the TRUE sequence length S gives the exact mean-pool.
    rewards = sums[:B, 0:1] / float(S) + bias[0, 0]          # (B, 1)
    diff = rewards - labels.astype(jnp.float32)
    return jnp.mean(diff * diff)                             # MSELoss (mean reduction)


if __name__ == "__main__":
    # TODO(synk): the `has_parameter(base_model.forward, 'labels')` branch (base
    # model computes its own loss) is Python reflection, not compute; only the
    # external-MSELoss branch is implemented here.
    B, S, H = 2, 8, 32

    key = jax.random.PRNGKey(0)
    kx, kw, kl = jax.random.split(key, 3)

    x = jax.random.normal(kx, (B, S, H), dtype=jnp.float32)        # hidden states
    labels = jax.random.normal(kl, (B, 1), dtype=jnp.float32)      # regression labels
    w = jax.random.normal(kw, (1, H), dtype=jnp.float32) * 0.02    # reward head weight
    b = jnp.zeros((1, 1), dtype=jnp.float32)                       # reward head bias

    loss = reward_model_loss(x, w, b, labels)
    jax.block_until_ready(loss)

    # Pure-JAX reference of the same forward (x cast to bf16 like the kernel stream).
    x_ref = x.astype(jnp.bfloat16).astype(jnp.float32)
    ref_rewards = jnp.mean(jnp.sum(x_ref * w[0][None, None, :], axis=-1),
                           axis=-1, keepdims=True) + b[0, 0]       # (B, 1)
    ref_loss = jnp.mean((ref_rewards - labels) ** 2)

    assert jnp.allclose(loss, ref_loss, atol=1e-3, rtol=1e-3), (loss, ref_loss)
    print("KERNEL_OK")
</pallas_src>

<mosaic_0001>
module attributes {stable_mosaic.version = 11 : i64} {
  func.func @reward_head_kernel(%arg0: i32, %arg1: i32, %arg2: memref<8x16x128xbf16, #tpu.memory_space<vmem>>, %arg3: memref<128x128xf32, #tpu.memory_space<vmem>>, %arg4: memref<8x128xf32, #tpu.memory_space<vmem>>, %arg5: memref<8x128xf32, #tpu.memory_space<vmem>>) attributes {dimension_semantics = [#tpu.dimension_semantics<parallel>, #tpu.dimension_semantics<arbitrary>], iteration_bounds = array<i64: 1, 1>, scalar_prefetch = 0 : i64, scratch_operands = 1 : i64, tpu.core_type = #tpu.core_type<tc>, window_params = [{transform_indices = @transform_0, window_bounds = array<i64: 8, 16, 128>}, {pipeline_mode = #tpu.pipeline_mode<synchronous>, transform_indices = @transform_1, window_bounds = array<i64: 128, 128>}, {transform_indices = @transform_2, window_bounds = array<i64: 8, 128>}]} {
    %c0_i32 = arith.constant 0 : i32
    %0 = arith.cmpi eq, %arg1, %c0_i32 : i32
    %1 = arith.extui %0 : i1 to i32
    %c0_i32_0 = arith.constant 0 : i32
    %2 = arith.cmpi ne, %1, %c0_i32_0 : i32
    scf.if %2 {
      %cst_9 = arith.constant 0.000000e+00 : f32
      %12 = vector.broadcast %cst_9 : f32 to vector<8x128xf32>
      %c0_10 = arith.constant 0 : index
      %c0_11 = arith.constant 0 : index
      %13 = vector.load %arg5[%c0_10, %c0_11] : memref<8x128xf32, #tpu.memory_space<vmem>>, vector<8x128xf32>
      tpu.vector_store %arg5[%c0_10, %c0_11], %12 {strides = array<i32>} : memref<8x128xf32, #tpu.memory_space<vmem>>, vector<8x128xf32>,
    } else {
    }
    %c0 = arith.constant 0 : index
    %c0_1 = arith.constant 0 : index
    %3 = vector.load %arg5[%c0, %c0_1] : memref<8x128xf32, #tpu.memory_space<vmem>>, vector<8x128xf32>
    %c0_2 = arith.constant 0 : index
    %c0_3 = arith.constant 0 : index
    %c0_4 = arith.constant 0 : index
    %4 = vector.load %arg2[%c0_2, %c0_3, %c0_4] : memref<8x16x128xbf16, #tpu.memory_space<vmem>>, vector<8x16x128xbf16>
    %5 = arith.extf %4 : vector<8x16x128xbf16> to vector<8x16x128xf32>
    %cst = arith.constant dense<0.000000e+00> : vector<8x128xf32>
    %6 = vector.multi_reduction <add>, %5, %cst [1] : vector<8x16x128xf32> to vector<8x128xf32>
    %7 = arith.addf %3, %6 : vector<8x128xf32>
    %c0_5 = arith.constant 0 : index
    %c0_6 = arith.constant 0 : index
    %8 = vector.load %arg5[%c0_5, %c0_6] : memref<8x128xf32, #tpu.memory_space<vmem>>, vector<8x128xf32>
    tpu.vector_store %arg5[%c0_5, %c0_6], %7 {strides = array<i32>} : memref<8x128xf32, #tpu.memory_space<vmem>>, vector<8x128xf32>,
    %c0_i32_7 = arith.constant 0 : i32
    %9 = arith.cmpi eq, %arg1, %c0_i32_7 : i32
    %10 = arith.extui %9 : i1 to i32
    %c0_i32_8 = arith.constant 0 : i32
    %11 = arith.cmpi ne, %10, %c0_i32_8 : i32
    scf.if %11 {
      %c0_9 = arith.constant 0 : index
      %c0_10 = arith.constant 0 : index
      %12 = vector.load %arg5[%c0_9, %c0_10] : memref<8x128xf32, #tpu.memory_space<vmem>>, vector<8x128xf32>
      %c0_11 = arith.constant 0 : index
      %c0_12 = arith.constant 0 : index
      %13 = vector.load %arg3[%c0_11, %c0_12] : memref<128x128xf32, #tpu.memory_space<vmem>>, vector<128x128xf32>
      %cst_13 = arith.constant dense<0.000000e+00> : vector<8x128xf32>
      %14 = tpu.matmul %12, %13, %cst_13 {dimension_numbers = #tpu.dot_dimension_numbers<[1], [0], [0], [1], [0, 0, 1, 1], [], []>} : vector<8x128xf32>, vector<128x128xf32>, vector<8x128xf32> -> vector<8x128xf32>
      %c0_14 = arith.constant 0 : index
      %c0_15 = arith.constant 0 : index
      %15 = vector.load %arg4[%c0_14, %c0_15] : memref<8x128xf32, #tpu.memory_space<vmem>>, vector<8x128xf32>
      tpu.vector_store %arg4[%c0_14, %c0_15], %14 {strides = array<i32>} : memref<8x128xf32, #tpu.memory_space<vmem>>, vector<8x128xf32>,
    } else {
    }
    return
  }
  func.func @transform_0(%arg0: i32, %arg1: i32) -> (i32, i32, i32) {
    %c0_i32 = arith.constant 0 : i32
    %c0_i32_0 = arith.constant 0 : i32
    return %arg0, %arg1, %c0_i32 : i32, i32, i32
  }
  func.func @transform_1(%arg0: i32, %arg1: i32) -> (i32, i32) {
    %c0_i32 = arith.constant 0 : i32
    %c0_i32_0 = arith.constant 0 : i32
    %c0_i32_1 = arith.constant 0 : i32
    return %c0_i32, %c0_i32_0 : i32, i32
  }
  func.func @transform_2(%arg0: i32, %arg1: i32) -> (i32, i32) {
    %c0_i32 = arith.constant 0 : i32
    %c0_i32_0 = arith.constant 0 : i32
    return %arg0, %c0_i32 : i32, i32
  }
}

</mosaic_0001>

<llo_original>
// kernel: tpu_custom_call.1
$region0: #{tpu_custom_call.1}
  #allocation0 [shape = 'u32[]', space=smem, size = 0x4, offset = 0x4, fixed_abs, tag = 'smem constant byte address 0x4 - core index']
  #allocation1 [shape = 'u32[72,128]{1,0:T(1,128)}', space=vmem, size = 0x9000, scoped, tag = 'internal scratch']
  #allocation2 [shape = 'f32[8,128]{1,0:T(8,128)}', space=vmem, size = 0x1000, scoped, tag = 'scratch operand']
  %s0 = inlined_call_operand.hbm [shape: bf16[8,16,128], index: 0, kind: input, shape index: {}]
  %s1 = inlined_call_operand.hbm [shape: f32[128,128], index: 1, kind: input, shape index: {}]
  %s2 = inlined_call_operand.hbm [shape: f32[8,128], index: 2, kind: output, shape index: {}]
  %s3 = sld [smem:[#allocation0]]
  $region34: #{tpu_custom_call.1} parent=0
    _
  %s5 = ssub.s32 1, %s3
  %s6 = scalar_select 0, %s5, %s3
  $region1: #{tpu_custom_call.1} parent=0
    #allocation3 [shape = 'u8[32768]{0}', space=vmem, size = 0x8000, scoped, tag = 'input window, operand 0, single buffered']
    #allocation4 [shape = 's32[1]{0}', space=sflag, size = 0x4, scoped, tag = 'scoped memory for tpu_custom_call.1']
    #allocation5 [shape = 's32[1]{0}', space=sflag, size = 0x4, scoped, tag = 'scoped memory for tpu_custom_call.1']
    #allocation6 [shape = 'u8[65536]{0}', space=vmem, size = 0x10000, scoped, tag = 'input window, operand 1, single buffered']
    #allocation7 [shape = 's32[1]{0}', space=sflag, size = 0x4, scoped, tag = 'scoped memory for tpu_custom_call.1']
    #allocation8 [shape = 'u8[4096]{0}', space=vmem, size = 0x1000, scoped, tag = 'output window, operand 0, single buffered']
    %7 = vsyncpa [#allocation4], 0
    %8 = vsyncpa [#allocation7], 0
    %9 = vsyncpa [#allocation5], 0
    // Predicated region
    $region2: #{tpu_custom_call.1} parent=1 // pred_check
      _
    $region3: #{tpu_custom_call.1} parent=1 // pred_check_branch
      %11 = sbr.rel (0) target = $region5
    $region4: #{tpu_custom_call.1} parent=1 // pred_region
      %13 = vsyncadd [#allocation4], 0
      %s14 = sshll.u32 %s0, 4
      %s15 = int_to_ptr.hbm [resolvable:$true] %s14
      %s16 = sshll.u32 [#allocation3], 4
      %s17 = int_to_ptr.vmem [resolvable:$true] %s16
      %22 = dma.hbm_to_vmem [thread:$0]  %s15, 1024, %s17, [#allocation4], 64, 64, 4
    $region5: #{tpu_custom_call.1} parent=1 // pred_fallthru
      _
    // Predicated region
    $region6: #{tpu_custom_call.1} parent=1 // pred_check
      _
    $region7: #{tpu_custom_call.1} parent=1 // pred_check_branch
      %24 = sbr.rel (0) target = $region9
    $region8: #{tpu_custom_call.1} parent=1 // pred_region
      %26 = vsyncadd [#allocation7], 0
      %s27 = sshll.u32 %s1, 4
      %s28 = int_to_ptr.hbm [resolvable:$true] %s27
      %s29 = sshll.u32 [#allocation6], 4
      %s30 = int_to_ptr.vmem [resolvable:$true] %s29
      %35 = dma.hbm_to_vmem [thread:$0]  %s28, 2048, %s30, [#allocation7], 128, 128, 8
    $region9: #{tpu_custom_call.1} parent=1 // pred_fallthru
      _
    // Predicated region
    $region10: #{tpu_custom_call.1} parent=1 // pred_check
      _
    $region11: #{tpu_custom_call.1} parent=1 // pred_check_branch
      %37 = sbr.rel (0) target = $region13
    $region12: #{tpu_custom_call.1} parent=1 // pred_region
      %39 = dma.done [#allocation4], 1024
    $region13: #{tpu_custom_call.1} parent=1 // pred_fallthru
      _
    // Predicated region
    $region14: #{tpu_custom_call.1} parent=1 // pred_check
      _
    $region15: #{tpu_custom_call.1} parent=1 // pred_check_branch
      %41 = sbr.rel (0) target = $region17
    $region16: #{tpu_custom_call.1} parent=1 // pred_region
      %43 = dma.done [#allocation7], 2048
    $region17: #{tpu_custom_call.1} parent=1 // pred_fallthru
      _
    %p44 = scmp.eq.s32.totalorder 0, 0
    // Predicated region
    $region18: #{tpu_custom_call.1} parent=1 // pred_check
      %p45 = pneg %p44
    $region19: #{tpu_custom_call.1} parent=1 // pred_check_branch
      %47 = sbr.rel (%p45) target = $region21
    $region20: #{tpu_custom_call.1} parent=1 // pred_region
      %48 = vst [vmem:[#allocation2] sm:$0xff] 0.0
    $region21: #{tpu_custom_call.1} parent=1 // pred_fallthru
      _
    %v49 = vld [vmem:[#allocation2] sm:$0xff]
    %v50 = vld [vmem:[#allocation3] sm:$0xf]
    %v51 = vld [vmem:[#allocation3 + $0x4] sm:$0xf]
    %v52 = vld [vmem:[#allocation3 + $0x8] sm:$0xf]
    %v53 = vld [vmem:[#allocation3 + $0xc] sm:$0xf]
    %v54 = vld [vmem:[#allocation3 + $0x10] sm:$0xf]
    %v55 = vld [vmem:[#allocation3 + $0x14] sm:$0xf]
    %v56 = vld [vmem:[#allocation3 + $0x18] sm:$0xf]
    %v57 = vld [vmem:[#allocation3 + $0x1c] sm:$0xf]
    %v58 = vld [vmem:[#allocation3 + $0x20] sm:$0xf]
    %v59 = vld [vmem:[#allocation3 + $0x24] sm:$0xf]
    %v60 = vld [vmem:[#allocation3 + $0x28] sm:$0xf]
    %v61 = vld [vmem:[#allocation3 + $0x2c] sm:$0xf]
    %v62 = vld [vmem:[#allocation3 + $0x30] sm:$0xf]
    %v63 = vld [vmem:[#allocation3 + $0x34] sm:$0xf]
    %v64 = vld [vmem:[#allocation3 + $0x38] sm:$0xf]
    %v65 = vld [vmem:[#allocation3 + $0x3c] sm:$0xf]
    %v66 = vunpack.c.l.bf16 %v50
    %v67 = vunpack.c.l.bf16 %v51
    %v68 = vunpack.c.l.bf16 %v52
    %v69 = vunpack.c.l.bf16 %v53
    %v70 = vunpack.c.l.bf16 %v54
    %v71 = vunpack.c.l.bf16 %v55
    %v72 = vunpack.c.l.bf16 %v56
    %v73 = vunpack.c.l.bf16 %v57
    %v74 = vunpack.c.l.bf16 %v58
    %v75 = vunpack.c.l.bf16 %v59
    %v76 = vunpack.c.l.bf16 %v60
    %v77 = vunpack.c.l.bf16 %v61
    %v78 = vunpack.c.l.bf16 %v62
    %v79 = vunpack.c.l.bf16 %v63
    %v80 = vunpack.c.l.bf16 %v64
    %v81 = vunpack.c.l.bf16 %v65
    %v82 = vadd.f32 %v66, %v67
    %v83 = vrot.slane %v82, 4
    %v84 = vadd.f32 %v82, %v83
    %v85 = vrot.slane %v84, 2
    %v86 = vadd.f32 %v84, %v85
    %v87 = vrot.slane %v86, 1
    %v88 = vadd.f32 %v86, %v87
    %v89 = vadd.f32 %v68, %v69
    %v90 = vrot.slane %v89, 4
    %v91 = vadd.f32 %v89, %v90
    %v92 = vrot.slane %v91, 2
    %v93 = vadd.f32 %v91, %v92
    %v94 = vrot.slane %v93, 1
    %v95 = vadd.f32 %v93, %v94
    %v96 = vadd.f32 %v70, %v71
    %v97 = vrot.slane %v96, 4
    %v98 = vadd.f32 %v96, %v97
    %v99 = vrot.slane %v98, 2
    %v100 = vadd.f32 %v98, %v99
    %v101 = vrot.slane %v100, 1
    %v102 = vadd.f32 %v100, %v101
    %v103 = vadd.f32 %v72, %v73
    %v104 = vrot.slane %v103, 4
    %v105 = vadd.f32 %v103, %v104
    %v106 = vrot.slane %v105, 2
    %v107 = vadd.f32 %v105, %v106
    %v108 = vrot.slane %v107, 1
    %v109 = vadd.f32 %v107, %v108
    %v110 = vadd.f32 %v74, %v75
    %v111 = vrot.slane %v110, 4
    %v112 = vadd.f32 %v110, %v111
    %v113 = vrot.slane %v112, 2
    %v114 = vadd.f32 %v112, %v113
    %v115 = vrot.slane %v114, 1
    %v116 = vadd.f32 %v114, %v115
    %v117 = vadd.f32 %v76, %v77
    %v118 = vrot.slane %v117, 4
    %v119 = vadd.f32 %v117, %v118
    %v120 = vrot.slane %v119, 2
    %v121 = vadd.f32 %v119, %v120
    %v122 = vrot.slane %v121, 1
    %v123 = vadd.f32 %v121, %v122
    %v124 = vadd.f32 %v78, %v79
    %v125 = vrot.slane %v124, 4
    %v126 = vadd.f32 %v124, %v125
    %v127 = vrot.slane %v126, 2
    %v128 = vadd.f32 %v126, %v127
    %v129 = vrot.slane %v128, 1
    %v130 = vadd.f32 %v128, %v129
    %v131 = vadd.f32 %v80, %v81
    %v132 = vrot.slane %v131, 4
    %v133 = vadd.f32 %v131, %v132
    %v134 = vrot.slane %v133, 2
    %v135 = vadd.f32 %v133, %v134
    %v136 = vrot.slane %v135, 1
    %v137 = vadd.f32 %v135, %v136
    %vm146 = vcmask 1041409
    %v147 = vsel %vm146, %v95, %v88
    %vm148 = vcmask 1042434
    %v149 = vsel %vm148, %v102, %v147
    %vm150 = vcmask 1043459
    %v151 = vsel %vm150, %v109, %v149
    %vm152 = vcmask 1044484
    %v153 = vsel %vm152, %v116, %v151
    %vm154 = vcmask 1045509
    %v155 = vsel %vm154, %v123, %v153
    %vm156 = vcmask 1046534
    %v157 = vsel %vm156, %v130, %v155
    %vm158 = vcmask 1047559
    %v159 = vsel %vm158, %v137, %v157
    %v161 = vadd.f32 %v49, %v159
    %162 = vst [vmem:[#allocation2] sm:$0xff] %v161
    // Predicated region
    $region22: #{tpu_custom_call.1} parent=1 // pred_check
      %p163 = pneg %p44
    $region23: #{tpu_custom_call.1} parent=1 // pred_check_branch
      %165 = sbr.rel (%p163) target = $region25
    $region24: #{tpu_custom_call.1} parent=1 // pred_region
      %v166 = vld [vmem:[#allocation2] sm:$0xff]
      %v167 = vld [vmem:[#allocation6] sm:$0xff]
      %v168 = vld [vmem:[#allocation6 + $0x8] sm:$0xff]
      %v169 = vld [vmem:[#allocation6 + $0x10] sm:$0xff]
      %v170 = vld [vmem:[#allocation6 + $0x18] sm:$0xff]
      %v171 = vld [vmem:[#allocation6 + $0x20] sm:$0xff]
      %v172 = vld [vmem:[#allocation6 + $0x28] sm:$0xff]
      %v173 = vld [vmem:[#allocation6 + $0x30] sm:$0xff]
      %v174 = vld [vmem:[#allocation6 + $0x38] sm:$0xff]
      %v175 = vld [vmem:[#allocation6 + $0x40] sm:$0xff]
      %v176 = vld [vmem:[#allocation6 + $0x48] sm:$0xff]
      %v177 = vld [vmem:[#allocation6 + $0x50] sm:$0xff]
      %v178 = vld [vmem:[#allocation6 + $0x58] sm:$0xff]
      %v179 = vld [vmem:[#allocation6 + $0x60] sm:$0xff]
      %v180 = vld [vmem:[#allocation6 + $0x68] sm:$0xff]
      %v181 = vld [vmem:[#allocation6 + $0x70] sm:$0xff]
      %v182 = vld [vmem:[#allocation6 + $0x78] sm:$0xff]
      %183 = vmatpush.msra.mxu0 %v182
      %184 = vmatpush.msra.mxu0 %v181
      %185 = vmatpush.msra.mxu0 %v180
      %186 = vmatpush.msra.mxu0 %v179
      %187 = vmatpush.msra.mxu0 %v178
      %188 = vmatpush.msra.mxu0 %v177
      %189 = vmatpush.msra.mxu0 %v176
      %190 = vmatpush.msra.mxu0 %v175
      %191 = vmatpush.msra.mxu0 %v174
      %192 = vmatpush.msra.mxu0 %v173
      %193 = vmatpush.msra.mxu0 %v172
      %194 = vmatpush.msra.mxu0 %v171
      %195 = vmatpush.msra.mxu0 %v170
      %196 = vmatpush.msra.mxu0 %v169
      %197 = vmatpush.msra.mxu0 %v168
      %198 = vmatpush.msra.mxu0 %v167
      %199 = vmatmul.f32.gmra.mxu0 %v166
      %v200 = vpop.f32.mrf.mxu0
      %v201 = vadd.f32 0.0, %v200
      %202 = vdwg.mxu0
      %203 = vst [vmem:[#allocation8] sm:$0xff] %v201
    $region25: #{tpu_custom_call.1} parent=1 // pred_fallthru
      _
    // Predicated region
    $region26: #{tpu_custom_call.1} parent=1 // pred_check
      _
    $region27: #{tpu_custom_call.1} parent=1 // pred_check_branch
      %205 = sbr.rel (0) target = $region29
    $region28: #{tpu_custom_call.1} parent=1 // pred_region
      %207 = vsyncadd [#allocation5], 0
      %s209 = sshll.u32 [#allocation8], 4
      %s210 = int_to_ptr.vmem [resolvable:$true] %s209
      %s211 = sshll.u32 %s2, 4
      %s212 = int_to_ptr.hbm [resolvable:$true] %s211
      %214 = dma.vmem_to_hbm [thread:$0]  %s210, 128, %s212, [#allocation5]
    $region29: #{tpu_custom_call.1} parent=1 // pred_fallthru
      _
    // Predicated region
    $region30: #{tpu_custom_call.1} parent=1 // pred_check
      _
    $region31: #{tpu_custom_call.1} parent=1 // pred_check_branch
      %216 = sbr.rel (0) target = $region33
    $region32: #{tpu_custom_call.1} parent=1 // pred_region
      %218 = dma.done [#allocation5], 128
    $region33: #{tpu_custom_call.1} parent=1 // pred_fallthru
      _
    %219 = vsyncpa [#allocation4], 1
    %220 = vsyncpa [#allocation7], 1
    %221 = vsyncpa [#allocation5], 1

</llo_original>
